<compile_context>
chip_gen: v6e
topology: v6e:2x2x1
jax: 0.10.0
libtpu: 0.0.40
codegen_flags: <defaults>
</compile_context>

<pallas_src>
import functools

import jax
import jax.numpy as jnp
from jax.experimental import pallas as pl
from jax.experimental.pallas import tpu as pltpu

LANE = 128  # pad hidden/output feature dims to one full lane width


def _round_up(x, m):
    return (x + m - 1) // m * m


# ----------------------------------------------------------------------------
# Fused AE kernel: chain of n_layers (matmul + bias [+ tanh]) on one batch tile.
#   x_ref     : (tb, in_dim)            f32   activations tile
#   w0_ref    : (in_dim, LANE)          bf16  layer-0 W^T (K dim unpadded)
#   wrest_ref : (n_layers-1, LANE, LANE) bf16  packed W^T of layers 1..n-1
#   b_ref     : (n_layers, 1, LANE)     f32   packed biases
#   o_ref     : (tb, LANE)              f32   lane-dense output tile
# ----------------------------------------------------------------------------
def _ae_fused_kernel(x_ref, w0_ref, wrest_ref, b_ref, o_ref, *,
                     n_layers, act_flags):
    h = x_ref[...].astype(jnp.bfloat16)           # bf16 MXU operand
    for i in range(n_layers):
        w = w0_ref[...] if i == 0 else wrest_ref[i - 1]
        s = jnp.dot(h, w, preferred_element_type=jnp.float32) + b_ref[i]
        if act_flags[i]:
            s = jnp.tanh(s)                        # f32 tanh (safe on v5e too)
        if i + 1 < n_layers:
            h = s.astype(jnp.bfloat16)             # next layer's MXU operand
        else:
            h = s
    o_ref[...] = h.astype(o_ref.dtype)             # lane-dense store


def ae_forward_fused(x, w0_t, w_rest, b_all, *, act_flags, out_dim, max_tb=1024):
    """x: (B, in_dim) f32.  w0_t: (in_dim, LANE) bf16.
    w_rest: (n_layers-1, LANE, LANE) bf16.  b_all: (n_layers, 1, LANE) f32."""
    n_layers = len(act_flags)
    B, in_dim = x.shape
    pad_f = w0_t.shape[1]
    assert w0_t.shape[0] == in_dim and w_rest.shape[0] == n_layers - 1

    # Resident weight/bias footprint guard: v7x has the smallest VMEM
    # (64 MiB physical, ~32 MiB scoped default).  Here it is ~132 KiB.
    resident = (w0_t.size * w0_t.dtype.itemsize
                + w_rest.size * w_rest.dtype.itemsize
                + b_all.size * b_all.dtype.itemsize)
    assert resident < 8 * 1024 * 1024, "resident weights exceed VMEM budget"

    # Batch tile: big tiles amortize the ~0.35us/step overhead; keep >= 2 grid
    # steps when B > 8 so the "parallel" axis shards across v7x's two TCs.
    tb = max(8, min(max_tb, _round_up(max(1, (B + 1) // 2), 8)))
    bp = _round_up(B, tb)
    if bp != B:
        x = jnp.pad(x, ((0, bp - B), (0, 0)))      # row pad only, no feature pad

    kernel = functools.partial(_ae_fused_kernel,
                               n_layers=n_layers,
                               act_flags=tuple(act_flags))

    out = pl.pallas_call(
        kernel,
        out_shape=jax.ShapeDtypeStruct((bp, pad_f), jnp.float32),
        grid=(bp // tb,),
        in_specs=[
            pl.BlockSpec((tb, in_dim), lambda i: (i, 0)),        # activations
            pl.BlockSpec(w0_t.shape, lambda i: (0, 0)),          # layer-0 W^T
            pl.BlockSpec(w_rest.shape, lambda i: (0, 0, 0)),     # packed W^T 1..n-1
            pl.BlockSpec(b_all.shape, lambda i: (0, 0, 0)),      # packed biases
        ],
        out_specs=pl.BlockSpec((tb, pad_f), lambda i: (i, 0)),
        compiler_params=pltpu.CompilerParams(
            dimension_semantics=("parallel",)),
    )(x, w0_t, w_rest, b_all)
    return out[:B, :out_dim]


# ----------------------------------------------------------------------------
# Parameter init (PyTorch nn.Linear weight convention: W is (out_f, in_f)).
# ----------------------------------------------------------------------------
def init_ff_params(key, layers):
    params = []
    for (out_f, in_f) in layers:
        key, wk, bk = jax.random.split(key, 3)
        bound = 1.0 / jnp.sqrt(jnp.float32(in_f))
        w = jax.random.uniform(wk, (out_f, in_f), jnp.float32, -bound, bound)
        b = jax.random.uniform(bk, (out_f,), jnp.float32, -bound, bound)
        params.append((w, b))
    return params, key


def flatten_ae_layers(enc_params, dec_params, fold_latent=True):
    """Flatten encoder+decoder into one layer list with tanh flags matching
    FF(act=tanh, final_act=False).  Optionally compose the two linears across
    the latent boundary (exact: no nonlinearity between them; AE.forward()
    only returns xhat, never z)."""
    enc_flags = [i != len(enc_params) - 1 for i in range(len(enc_params))]
    dec_flags = [i != len(dec_params) - 1 for i in range(len(dec_params))]
    if not fold_latent:
        return list(enc_params) + list(dec_params), enc_flags + dec_flags
    w_e, b_e = enc_params[-1]          # (latent, hidden)
    w_d, b_d = dec_params[0]           # (hidden, latent)
    w_fold = w_d @ w_e                 # (hidden, hidden), composed in f32
    b_fold = w_d @ b_e + b_d
    layers = list(enc_params[:-1]) + [(w_fold, b_fold)] + list(dec_params[1:])
    flags = enc_flags[:-1] + [dec_flags[0]] + dec_flags[1:]
    return layers, flags


def pack_params(layer_params, pad=LANE):
    """One-time packing: pre-transposed, zero-padded, bf16 weights.  Layer 0
    keeps K = in_dim (no padded-input slab needed); layers 1..n-1 are packed
    into a single (n-1, pad, pad) bf16 array, biases into (n, 1, pad) f32."""
    n = len(layer_params)
    assert n >= 2
    w0, _ = layer_params[0]
    out0, in_dim = w0.shape
    w0_t = (jnp.zeros((in_dim, pad), jnp.float32)
            .at[:, :out0].set(w0.T).astype(jnp.bfloat16))
    w_rest = []
    for (w, _) in layer_params[1:]:
        out_f, in_f = w.shape
        w_rest.append(jnp.zeros((pad, pad), jnp.float32)
                      .at[:in_f, :out_f].set(w.T))
    w_rest = jnp.stack(w_rest).astype(jnp.bfloat16)          # (n-1, pad, pad)
    b_all = []
    for (w, b) in layer_params:
        out_f = w.shape[0]
        b_all.append(jnp.zeros((1, pad), jnp.float32).at[0, :out_f].set(b))
    b_all = jnp.stack(b_all)                                  # (n, 1, pad)
    return w0_t, w_rest, b_all


# ----------------------------------------------------------------------------
# Pure-JAX references.
# ----------------------------------------------------------------------------
def _ref_ff(params, x):
    """Exact f32 reference for FF(act=tanh, final_act=False, non-residual)."""
    n = len(params)
    for i, (w, b) in enumerate(params):
        s = x @ w.T + b
        x = jnp.tanh(s) if i != n - 1 else s
    return x


def _ref_fused_bf16(layer_params, act_flags, x):
    """Emulates the kernel's math (bf16 operands, f32 accumulation, fold)."""
    h = x
    for (w, b), act in zip(layer_params, act_flags):
        s = jnp.dot(h.astype(jnp.bfloat16), w.T.astype(jnp.bfloat16),
                    preferred_element_type=jnp.float32) + b
        h = jnp.tanh(s) if act else s
    return h


if __name__ == "__main__":
    # Cartpole-style autoencoder: state dim 4, hidden 64, latent 2.
    # NOTE: assumes the module globals act=tanh, final_act=False, batch_norm=False.
    state_dim, hidden, latent = 4, 64, 2
    enc_layers = [(hidden, state_dim), (hidden, hidden), (latent, hidden)]
    dec_layers = [(hidden, latent), (hidden, hidden), (state_dim, hidden)]

    key = jax.random.PRNGKey(0)
    enc_params, key = init_ff_params(key, enc_layers)
    dec_params, key = init_ff_params(key, dec_layers)

    layer_params, act_flags = flatten_ae_layers(enc_params, dec_params,
                                                fold_latent=True)
    w0_t, w_rest, b_all = pack_params(layer_params)

    fwd = jax.jit(functools.partial(ae_forward_fused,
                                    act_flags=tuple(act_flags),
                                    out_dim=state_dim))

    for batch in (8, 256):   # single-tile case and a 2-step "parallel" grid
        key, xk = jax.random.split(key)
        x = jax.random.normal(xk, (batch, state_dim), jnp.float32)
        xhat = fwd(x, w0_t, w_rest, b_all)
        jax.block_until_ready(xhat)
        assert xhat.shape == (batch, state_dim)

        ref_bf16 = _ref_fused_bf16(layer_params, act_flags, x)
        ref_f32 = _ref_ff(dec_params, _ref_ff(enc_params, x))
        assert jnp.allclose(xhat, ref_bf16, atol=2e-3, rtol=2e-3)
        assert jnp.allclose(xhat, ref_f32, atol=5e-2, rtol=5e-2)

    print("KERNEL_OK")
</pallas_src>

<mosaic_0001>
module attributes {stable_mosaic.version = 11 : i64} {
  func.func @_ae_fused_kernel(%arg0: i32, %arg1: memref<8x4xf32, #tpu.memory_space<vmem>>, %arg2: memref<4x128xbf16, #tpu.memory_space<vmem>>, %arg3: memref<4x128x128xbf16, #tpu.memory_space<vmem>>, %arg4: memref<5x1x128xf32, #tpu.memory_space<vmem>>, %arg5: memref<8x128xf32, #tpu.memory_space<vmem>>) attributes {dimension_semantics = [#tpu.dimension_semantics<parallel>], iteration_bounds = array<i64: 1>, scalar_prefetch = 0 : i64, scratch_operands = 0 : i64, tpu.core_type = #tpu.core_type<tc>, window_params = [{transform_indices = @transform_0, window_bounds = array<i64: 8, 4>}, {pipeline_mode = #tpu.pipeline_mode<synchronous>, transform_indices = @transform_1, window_bounds = array<i64: 4, 128>}, {pipeline_mode = #tpu.pipeline_mode<synchronous>, transform_indices = @transform_2, window_bounds = array<i64: 4, 128, 128>}, {pipeline_mode = #tpu.pipeline_mode<synchronous>, transform_indices = @transform_3, window_bounds = array<i64: 5, 1, 128>}, {transform_indices = @transform_4, window_bounds = array<i64: 8, 128>}]} {
    %c0 = arith.constant 0 : index
    %c0_0 = arith.constant 0 : index
    %0 = vector.load %arg1[%c0, %c0_0] : memref<8x4xf32, #tpu.memory_space<vmem>>, vector<8x4xf32>
    %1 = arith.truncf %0 : vector<8x4xf32> to vector<8x4xbf16>
    %c0_1 = arith.constant 0 : index
    %c0_2 = arith.constant 0 : index
    %2 = vector.load %arg2[%c0_1, %c0_2] : memref<4x128xbf16, #tpu.memory_space<vmem>>, vector<4x128xbf16>
    %cst = arith.constant dense<0.000000e+00> : vector<8x128xf32>
    %3 = tpu.matmul %1, %2, %cst {dimension_numbers = #tpu.dot_dimension_numbers<[1], [0], [0], [1], [0, 0, 1, 1], [], []>} : vector<8x4xbf16>, vector<4x128xbf16>, vector<8x128xf32> -> vector<8x128xf32>
    %c0_3 = arith.constant 0 : index
    %c0_4 = arith.constant 0 : index
    %c0_5 = arith.constant 0 : index
    %4 = vector.load %arg4[%c0_3, %c0_4, %c0_5] : memref<5x1x128xf32, #tpu.memory_space<vmem>>, vector<1x1x128xf32>
    %5 = vector.shape_cast %4 : vector<1x1x128xf32> to vector<1x128xf32>
    %6 = vector.broadcast %5 : vector<1x128xf32> to vector<8x128xf32>
    %7 = arith.addf %3, %6 : vector<8x128xf32>
    %8 = math.tanh %7 : vector<8x128xf32>
    %9 = arith.truncf %8 : vector<8x128xf32> to vector<8x128xbf16>
    %c0_6 = arith.constant 0 : index
    %c0_7 = arith.constant 0 : index
    %c0_8 = arith.constant 0 : index
    %10 = vector.load %arg3[%c0_6, %c0_7, %c0_8] : memref<4x128x128xbf16, #tpu.memory_space<vmem>>, vector<1x128x128xbf16>
    %11 = vector.shape_cast %10 : vector<1x128x128xbf16> to vector<128x128xbf16>
    %cst_9 = arith.constant dense<0.000000e+00> : vector<8x128xf32>
    %12 = tpu.matmul %9, %11, %cst_9 {dimension_numbers = #tpu.dot_dimension_numbers<[1], [0], [0], [1], [0, 0, 1, 1], [], []>} : vector<8x128xbf16>, vector<128x128xbf16>, vector<8x128xf32> -> vector<8x128xf32>
    %c1 = arith.constant 1 : index
    %c0_10 = arith.constant 0 : index
    %c0_11 = arith.constant 0 : index
    %13 = vector.load %arg4[%c1, %c0_10, %c0_11] : memref<5x1x128xf32, #tpu.memory_space<vmem>>, vector<1x1x128xf32>
    %14 = vector.shape_cast %13 : vector<1x1x128xf32> to vector<1x128xf32>
    %15 = vector.broadcast %14 : vector<1x128xf32> to vector<8x128xf32>
    %16 = arith.addf %12, %15 : vector<8x128xf32>
    %17 = math.tanh %16 : vector<8x128xf32>
    %18 = arith.truncf %17 : vector<8x128xf32> to vector<8x128xbf16>
    %c1_12 = arith.constant 1 : index
    %c0_13 = arith.constant 0 : index
    %c0_14 = arith.constant 0 : index
    %19 = vector.load %arg3[%c1_12, %c0_13, %c0_14] : memref<4x128x128xbf16, #tpu.memory_space<vmem>>, vector<1x128x128xbf16>
    %20 = vector.shape_cast %19 : vector<1x128x128xbf16> to vector<128x128xbf16>
    %cst_15 = arith.constant dense<0.000000e+00> : vector<8x128xf32>
    %21 = tpu.matmul %18, %20, %cst_15 {dimension_numbers = #tpu.dot_dimension_numbers<[1], [0], [0], [1], [0, 0, 1, 1], [], []>} : vector<8x128xbf16>, vector<128x128xbf16>, vector<8x128xf32> -> vector<8x128xf32>
    %c2 = arith.constant 2 : index
    %c0_16 = arith.constant 0 : index
    %c0_17 = arith.constant 0 : index
    %22 = vector.load %arg4[%c2, %c0_16, %c0_17] : memref<5x1x128xf32, #tpu.memory_space<vmem>>, vector<1x1x128xf32>
    %23 = vector.shape_cast %22 : vector<1x1x128xf32> to vector<1x128xf32>
    %24 = vector.broadcast %23 : vector<1x128xf32> to vector<8x128xf32>
    %25 = arith.addf %21, %24 : vector<8x128xf32>
    %26 = math.tanh %25 : vector<8x128xf32>
    %27 = arith.truncf %26 : vector<8x128xf32> to vector<8x128xbf16>
    %c2_18 = arith.constant 2 : index
    %c0_19 = arith.constant 0 : index
    %c0_20 = arith.constant 0 : index
    %28 = vector.load %arg3[%c2_18, %c0_19, %c0_20] : memref<4x128x128xbf16, #tpu.memory_space<vmem>>, vector<1x128x128xbf16>
    %29 = vector.shape_cast %28 : vector<1x128x128xbf16> to vector<128x128xbf16>
    %cst_21 = arith.constant dense<0.000000e+00> : vector<8x128xf32>
    %30 = tpu.matmul %27, %29, %cst_21 {dimension_numbers = #tpu.dot_dimension_numbers<[1], [0], [0], [1], [0, 0, 1, 1], [], []>} : vector<8x128xbf16>, vector<128x128xbf16>, vector<8x128xf32> -> vector<8x128xf32>
    %c3 = arith.constant 3 : index
    %c0_22 = arith.constant 0 : index
    %c0_23 = arith.constant 0 : index
    %31 = vector.load %arg4[%c3, %c0_22, %c0_23] : memref<5x1x128xf32, #tpu.memory_space<vmem>>, vector<1x1x128xf32>
    %32 = vector.shape_cast %31 : vector<1x1x128xf32> to vector<1x128xf32>
    %33 = vector.broadcast %32 : vector<1x128xf32> to vector<8x128xf32>
    %34 = arith.addf %30, %33 : vector<8x128xf32>
    %35 = math.tanh %34 : vector<8x128xf32>
    %36 = arith.truncf %35 : vector<8x128xf32> to vector<8x128xbf16>
    %c3_24 = arith.constant 3 : index
    %c0_25 = arith.constant 0 : index
    %c0_26 = arith.constant 0 : index
    %37 = vector.load %arg3[%c3_24, %c0_25, %c0_26] : memref<4x128x128xbf16, #tpu.memory_space<vmem>>, vector<1x128x128xbf16>
    %38 = vector.shape_cast %37 : vector<1x128x128xbf16> to vector<128x128xbf16>
    %cst_27 = arith.constant dense<0.000000e+00> : vector<8x128xf32>
    %39 = tpu.matmul %36, %38, %cst_27 {dimension_numbers = #tpu.dot_dimension_numbers<[1], [0], [0], [1], [0, 0, 1, 1], [], []>} : vector<8x128xbf16>, vector<128x128xbf16>, vector<8x128xf32> -> vector<8x128xf32>
    %c4 = arith.constant 4 : index
    %c0_28 = arith.constant 0 : index
    %c0_29 = arith.constant 0 : index
    %40 = vector.load %arg4[%c4, %c0_28, %c0_29] : memref<5x1x128xf32, #tpu.memory_space<vmem>>, vector<1x1x128xf32>
    %41 = vector.shape_cast %40 : vector<1x1x128xf32> to vector<1x128xf32>
    %42 = vector.broadcast %41 : vector<1x128xf32> to vector<8x128xf32>
    %43 = arith.addf %39, %42 : vector<8x128xf32>
    %c0_30 = arith.constant 0 : index
    %c0_31 = arith.constant 0 : index
    %44 = vector.load %arg5[%c0_30, %c0_31] : memref<8x128xf32, #tpu.memory_space<vmem>>, vector<8x128xf32>
    tpu.vector_store %arg5[%c0_30, %c0_31], %43 {strides = array<i32>} : memref<8x128xf32, #tpu.memory_space<vmem>>, vector<8x128xf32>,
    return
  }
  func.func @transform_0(%arg0: i32) -> (i32, i32) {
    %c0_i32 = arith.constant 0 : i32
    %c0_i32_0 = arith.constant 0 : i32
    return %arg0, %c0_i32 : i32, i32
  }
  func.func @transform_1(%arg0: i32) -> (i32, i32) {
    %c0_i32 = arith.constant 0 : i32
    %c0_i32_0 = arith.constant 0 : i32
    %c0_i32_1 = arith.constant 0 : i32
    return %c0_i32, %c0_i32_0 : i32, i32
  }
  func.func @transform_2(%arg0: i32) -> (i32, i32, i32) {
    %c0_i32 = arith.constant 0 : i32
    %c0_i32_0 = arith.constant 0 : i32
    %c0_i32_1 = arith.constant 0 : i32
    %c0_i32_2 = arith.constant 0 : i32
    return %c0_i32, %c0_i32_0, %c0_i32_1 : i32, i32, i32
  }
  func.func @transform_3(%arg0: i32) -> (i32, i32, i32) {
    %c0_i32 = arith.constant 0 : i32
    %c0_i32_0 = arith.constant 0 : i32
    %c0_i32_1 = arith.constant 0 : i32
    %c0_i32_2 = arith.constant 0 : i32
    return %c0_i32, %c0_i32_0, %c0_i32_1 : i32, i32, i32
  }
  func.func @transform_4(%arg0: i32) -> (i32, i32) {
    %c0_i32 = arith.constant 0 : i32
    %c0_i32_0 = arith.constant 0 : i32
    return %arg0, %c0_i32 : i32, i32
  }
}

</mosaic_0001>

<llo_original>
// kernel: ae_forward_fused.1
$region0: #{ae_forward_fused.1}
  #allocation0 [shape = 'u32[]', space=smem, size = 0x4, offset = 0x4, fixed_abs, tag = 'smem constant byte address 0x4 - core index']
  #allocation1 [shape = 'u32[144,128]{1,0:T(1,128)}', space=vmem, size = 0x12000, scoped, tag = 'internal scratch']
  %s0 = inlined_call_operand.vmem [shape: f32[8,4], index: 0, kind: input, shape index: {}]
  %s1 = inlined_call_operand.vmem [shape: bf16[4,128], index: 1, kind: input, shape index: {}]
  %s2 = inlined_call_operand.hbm [shape: bf16[4,128,128], index: 2, kind: input, shape index: {}]
  %s3 = inlined_call_operand.vmem [shape: f32[5,1,128], index: 3, kind: input, shape index: {}]
  %s4 = inlined_call_operand.vmem [shape: f32[8,128], index: 4, kind: output, shape index: {}]
  %s5 = sld [smem:[#allocation0]]
  $region30: #{ae_forward_fused.1} parent=0
    _
  %s7 = ssub.s32 1, %s5
  %s8 = scalar_select 0, %s7, %s5
  $region1: #{ae_forward_fused.1} parent=0
    #allocation2 [shape = 'u8[131072]{0}', space=vmem, size = 0x20000, scoped, tag = 'input window, operand 2, single buffered']
    #allocation3 [shape = 's32[1]{0}', space=sflag, size = 0x4, scoped, tag = 'scoped memory for ae_forward_fused.1']
    %9 = vsyncpa [#allocation3], 0
    // Predicated region
    $region2: #{ae_forward_fused.1} parent=1 // pred_check
      _
    $region3: #{ae_forward_fused.1} parent=1 // pred_check_branch
      %11 = sbr.rel (0) target = $region5
    $region4: #{ae_forward_fused.1} parent=1 // pred_region
      _
    $region5: #{ae_forward_fused.1} parent=1 // pred_fallthru
      _
    // Predicated region
    $region6: #{ae_forward_fused.1} parent=1 // pred_check
      _
    $region7: #{ae_forward_fused.1} parent=1 // pred_check_branch
      %13 = sbr.rel (0) target = $region9
    $region8: #{ae_forward_fused.1} parent=1 // pred_region
      _
    $region9: #{ae_forward_fused.1} parent=1 // pred_fallthru
      _
    // Predicated region
    $region10: #{ae_forward_fused.1} parent=1 // pred_check
      _
    $region11: #{ae_forward_fused.1} parent=1 // pred_check_branch
      %15 = sbr.rel (0) target = $region13
    $region12: #{ae_forward_fused.1} parent=1 // pred_region
      %s17 = ssub.s32 4096, 4096
      %18 = vsyncadd [#allocation3], %s17
      %s19 = sshll.u32 [#allocation2], 4
      %s20 = int_to_ptr.vmem [resolvable:$true] %s19
      %25 = dma.hbm_to_vmem [thread:$0]  %s2, 4096, %s20, [#allocation3], 64, 64, 4
    $region13: #{ae_forward_fused.1} parent=1 // pred_fallthru
      _
    // Predicated region
    $region14: #{ae_forward_fused.1} parent=1 // pred_check
      _
    $region15: #{ae_forward_fused.1} parent=1 // pred_check_branch
      %27 = sbr.rel (0) target = $region17
    $region16: #{ae_forward_fused.1} parent=1 // pred_region
      _
    $region17: #{ae_forward_fused.1} parent=1 // pred_fallthru
      _
    // Predicated region
    $region18: #{ae_forward_fused.1} parent=1 // pred_check
      _
    $region19: #{ae_forward_fused.1} parent=1 // pred_check_branch
      %29 = sbr.rel (0) target = $region21
    $region20: #{ae_forward_fused.1} parent=1 // pred_region
      %30 = dma.done [#allocation3], 4096
    $region21: #{ae_forward_fused.1} parent=1 // pred_fallthru
      _
    %v32 = vld [vmem:[%s0] sm:$0xff]
    %v33 = vpack.c.bf16 %v32, %v32
    %v34 = vld [vmem:[%s1] sm:$0x3]
    %v35 = vld [vmem:[%s3] sm:$0x1]
    %v37 = vlaneseq
    %v38 = vshrl.u32 %v37, 7
    %v39 = vsub.s32 0, %v38
    %v40 = vrot.slane %v35, %v39
    %vm42 = vcmask 31744
    %v44 = vsel %vm42, %v33, 0
    %vm46 = vcmask 1041408
    %v48 = vsel %vm46, %v34, 0
    %50 = vmatprep.subr.bf16.mxu0 0
    %51 = vmatpush1.bf16.msra.mxu0 0
    %52 = vmatprep.subr.bf16.mxu0 0
    %53 = vmatpush1.bf16.msra.mxu0 0
    %54 = vmatprep.subr.bf16.mxu0 0
    %55 = vmatpush1.bf16.msra.mxu0 0
    %56 = vmatprep.subr.bf16.mxu0 0
    %57 = vmatpush1.bf16.msra.mxu0 0
    %58 = vmatprep.subr.bf16.mxu0 0
    %59 = vmatpush1.bf16.msra.mxu0 0
    %60 = vmatprep.subr.bf16.mxu0 0
    %61 = vmatpush1.bf16.msra.mxu0 0
    %62 = vmatprep.subr.bf16.mxu0 0
    %63 = vmatpush1.bf16.msra.mxu0 0
    %64 = vmatprep.subr.bf16.mxu0 0
    %65 = vmatpush1.bf16.msra.mxu0 %v48
    %66 = vmatprep.subr.bf16.mxu0 0
    %67 = vmatpush2.bf16.msra.mxu0 0
    %68 = vmatprep.subr.bf16.mxu0 0
    %69 = vmatpush2.bf16.msra.mxu0 0
    %70 = vmatprep.subr.bf16.mxu0 0
    %71 = vmatpush2.bf16.msra.mxu0 0
    %72 = vmatprep.subr.bf16.mxu0 0
    %73 = vmatpush2.bf16.msra.mxu0 0
    %74 = vmatprep.subr.bf16.mxu0 0
    %75 = vmatpush2.bf16.msra.mxu0 0
    %76 = vmatprep.subr.bf16.mxu0 0
    %77 = vmatpush2.bf16.msra.mxu0 0
    %78 = vmatprep.subr.bf16.mxu0 0
    %79 = vmatpush2.bf16.msra.mxu0 0
    %80 = vmatprep.subr.bf16.mxu0 0
    %81 = vmatpush2.bf16.msra.mxu0 0
    %82 = vmatprep.mubr.bf16.mxu0 0
    %83 = vmatmul.mubr.bf16.gmra.mxu0 %v44
    %v84 = vpop.f32.mrf.mxu0
    %v85 = vadd.f32 %v40, %v84
    %v86 = vpop.f32.mrf.mxu0
    %v87 = vpop.f32.mrf.mxu0
    %v88 = vpop.f32.mrf.mxu0
    %89 = vdwg.mxu0
    %v90 = vtanh.pop %v85
    %v91 = vpack.c.bf16 %v90, %v90
    %v92 = vld [vmem:[#allocation2] sm:$0xf]
    %v93 = vld [vmem:[#allocation2 + $0x4] sm:$0xf]
    %v94 = vld [vmem:[#allocation2 + $0x8] sm:$0xf]
    %v95 = vld [vmem:[#allocation2 + $0xc] sm:$0xf]
    %v96 = vld [vmem:[#allocation2 + $0x10] sm:$0xf]
    %v97 = vld [vmem:[#allocation2 + $0x14] sm:$0xf]
    %v98 = vld [vmem:[#allocation2 + $0x18] sm:$0xf]
    %v99 = vld [vmem:[#allocation2 + $0x1c] sm:$0xf]
    %v100 = vld [vmem:[#allocation2 + $0x20] sm:$0xf]
    %v101 = vld [vmem:[#allocation2 + $0x24] sm:$0xf]
    %v102 = vld [vmem:[#allocation2 + $0x28] sm:$0xf]
    %v103 = vld [vmem:[#allocation2 + $0x2c] sm:$0xf]
    %v104 = vld [vmem:[#allocation2 + $0x30] sm:$0xf]
    %v105 = vld [vmem:[#allocation2 + $0x34] sm:$0xf]
    %v106 = vld [vmem:[#allocation2 + $0x38] sm:$0xf]
    %v107 = vld [vmem:[#allocation2 + $0x3c] sm:$0xf]
    %s108 = scalar_lea.vmem %s3, 1
    %v109 = vld [vmem:[%s108] sm:$0x1]
    %v111 = vlaneseq
    %v112 = vshrl.u32 %v111, 7
    %v113 = vsub.s32 0, %v112
    %v114 = vrot.slane %v109, %v113
    %v132 = vunpack.c.l.b16 %v92
    %v133 = vunpack.c.l.b16 %v93
    %v134 = vunpack.c.l.b16 %v94
    %v135 = vunpack.c.l.b16 %v95
    %v136 = vunpack.c.l.b16 %v96
    %v137 = vunpack.c.l.b16 %v97
    %v138 = vunpack.c.l.b16 %v98
    %v139 = vunpack.c.l.b16 %v99
    %v140 = vunpack.c.l.b16 %v100
    %v141 = vunpack.c.l.b16 %v101
    %v142 = vunpack.c.l.b16 %v102
    %v143 = vunpack.c.l.b16 %v103
    %v144 = vunpack.c.l.b16 %v104
    %v145 = vunpack.c.l.b16 %v105
    %v146 = vunpack.c.l.b16 %v106
    %v147 = vunpack.c.l.b16 %v107
    %v148 = vpack.c.b16 %v133, %v132
    %v149 = vpack.c.b16 %v135, %v134
    %v150 = vpack.c.b16 %v137, %v136
    %v151 = vpack.c.b16 %v139, %v138
    %v152 = vpack.c.b16 %v141, %v140
    %v153 = vpack.c.b16 %v143, %v142
    %v154 = vpack.c.b16 %v145, %v144
    %v155 = vpack.c.b16 %v147, %v146
    %164 = vmatprep.subr.bf16.mxu0 0
    %165 = vmatpush1.bf16.msra.mxu0 %v155
    %166 = vmatprep.subr.bf16.mxu0 0
    %167 = vmatpush1.bf16.msra.mxu0 %v154
    %168 = vmatprep.subr.bf16.mxu0 0
    %169 = vmatpush1.bf16.msra.mxu0 %v153
    %170 = vmatprep.subr.bf16.mxu0 0
    %171 = vmatpush1.bf16.msra.mxu0 %v152
    %172 = vmatprep.subr.bf16.mxu0 0
    %173 = vmatpush1.bf16.msra.mxu0 %v151
    %174 = vmatprep.subr.bf16.mxu0 0
    %175 = vmatpush1.bf16.msra.mxu0 %v150
    %176 = vmatprep.subr.bf16.mxu0 0
    %177 = vmatpush1.bf16.msra.mxu0 %v149
    %178 = vmatprep.subr.bf16.mxu0 0
    %179 = vmatpush1.bf16.msra.mxu0 %v148
    %180 = vmatprep.subr.bf16.mxu0 0
    %181 = vmatpush2.bf16.msra.mxu0 0
    %182 = vmatprep.subr.bf16.mxu0 0
    %183 = vmatpush2.bf16.msra.mxu0 0
    %184 = vmatprep.subr.bf16.mxu0 0
    %185 = vmatpush2.bf16.msra.mxu0 0
    %186 = vmatprep.subr.bf16.mxu0 0
    %187 = vmatpush2.bf16.msra.mxu0 0
    %188 = vmatprep.subr.bf16.mxu0 0
    %189 = vmatpush2.bf16.msra.mxu0 0
    %190 = vmatprep.subr.bf16.mxu0 0
    %191 = vmatpush2.bf16.msra.mxu0 0
    %192 = vmatprep.subr.bf16.mxu0 0
    %193 = vmatpush2.bf16.msra.mxu0 0
    %194 = vmatprep.subr.bf16.mxu0 0
    %195 = vmatpush2.bf16.msra.mxu0 0
    %196 = vmatprep.mubr.bf16.mxu0 0
    %197 = vmatmul.mubr.bf16.gmra.mxu0 %v91
    %v198 = vpop.f32.mrf.mxu0
    %v199 = vadd.f32 %v114, %v198
    %v200 = vpop.f32.mrf.mxu0
    %v201 = vpop.f32.mrf.mxu0
    %v202 = vpop.f32.mrf.mxu0
    %203 = vdwg.mxu0
    %v204 = vtanh.pop %v199
    %v205 = vpack.c.bf16 %v204, %v204
    %s206 = scalar_lea.vmem [#allocation2], 64
    %v207 = vld [vmem:[%s206] sm:$0xf]
    %v208 = vld [vmem:[%s206 + $0x4] sm:$0xf]
    %v209 = vld [vmem:[%s206 + $0x8] sm:$0xf]
    %v210 = vld [vmem:[%s206 + $0xc] sm:$0xf]
    %v211 = vld [vmem:[%s206 + $0x10] sm:$0xf]
    %v212 = vld [vmem:[%s206 + $0x14] sm:$0xf]
    %v213 = vld [vmem:[%s206 + $0x18] sm:$0xf]
    %v214 = vld [vmem:[%s206 + $0x1c] sm:$0xf]
    %v215 = vld [vmem:[%s206 + $0x20] sm:$0xf]
    %v216 = vld [vmem:[%s206 + $0x24] sm:$0xf]
    %v217 = vld [vmem:[%s206 + $0x28] sm:$0xf]
    %v218 = vld [vmem:[%s206 + $0x2c] sm:$0xf]
    %v219 = vld [vmem:[%s206 + $0x30] sm:$0xf]
    %v220 = vld [vmem:[%s206 + $0x34] sm:$0xf]
    %v221 = vld [vmem:[%s206 + $0x38] sm:$0xf]
    %v222 = vld [vmem:[%s206 + $0x3c] sm:$0xf]
    %s223 = scalar_lea.vmem %s3, 2
    %v224 = vld [vmem:[%s223] sm:$0x1]
    %v226 = vlaneseq
    %v227 = vshrl.u32 %v226, 7
    %v228 = vsub.s32 0, %v227
    %v229 = vrot.slane %v224, %v228
    %v247 = vunpack.c.l.b16 %v207
    %v248 = vunpack.c.l.b16 %v208
    %v249 = vunpack.c.l.b16 %v209
    %v250 = vunpack.c.l.b16 %v210
    %v251 = vunpack.c.l.b16 %v211
    %v252 = vunpack.c.l.b16 %v212
    %v253 = vunpack.c.l.b16 %v213
    %v254 = vunpack.c.l.b16 %v214
    %v255 = vunpack.c.l.b16 %v215
    %v256 = vunpack.c.l.b16 %v216
    %v257 = vunpack.c.l.b16 %v217
    %v258 = vunpack.c.l.b16 %v218
    %v259 = vunpack.c.l.b16 %v219
    %v260 = vunpack.c.l.b16 %v220
    %v261 = vunpack.c.l.b16 %v221
    %v262 = vunpack.c.l.b16 %v222
    %v263 = vpack.c.b16 %v248, %v247
    %v264 = vpack.c.b16 %v250, %v249
    %v265 = vpack.c.b16 %v252, %v251
    %v266 = vpack.c.b16 %v254, %v253
    %v267 = vpack.c.b16 %v256, %v255
    %v268 = vpack.c.b16 %v258, %v257
    %v269 = vpack.c.b16 %v260, %v259
    %v270 = vpack.c.b16 %v262, %v261
    %279 = vmatprep.subr.bf16.mxu0 0
    %280 = vmatpush1.bf16.msra.mxu0 %v270
    %281 = vmatprep.subr.bf16.mxu0 0
    %282 = vmatpush1.bf16.msra.mxu0 %v269
    %283 = vmatprep.subr.bf16.mxu0 0
    %284 = vmatpush1.bf16.msra.mxu0 %v268
    %285 = vmatprep.subr.bf16.mxu0 0
    %286 = vmatpush1.bf16.msra.mxu0 %v267
    %287 = vmatprep.subr.bf16.mxu0 0
    %288 = vmatpush1.bf16.msra.mxu0 %v266
    %289 = vmatprep.subr.bf16.mxu0 0
    %290 = vmatpush1.bf16.msra.mxu0 %v265
    %291 = vmatprep.subr.bf16.mxu0 0
    %292 = vmatpush1.bf16.msra.mxu0 %v264
    %293 = vmatprep.subr.bf16.mxu0 0
    %294 = vmatpush1.bf16.msra.mxu0 %v263
    %295 = vmatprep.subr.bf16.mxu0 0
    %296 = vmatpush2.bf16.msra.mxu0 0
    %297 = vmatprep.subr.bf16.mxu0 0
    %298 = vmatpush2.bf16.msra.mxu0 0
    %299 = vmatprep.subr.bf16.mxu0 0
    %300 = vmatpush2.bf16.msra.mxu0 0
    %301 = vmatprep.subr.bf16.mxu0 0
    %302 = vmatpush2.bf16.msra.mxu0 0
    %303 = vmatprep.subr.bf16.mxu0 0
    %304 = vmatpush2.bf16.msra.mxu0 0
    %305 = vmatprep.subr.bf16.mxu0 0
    %306 = vmatpush2.bf16.msra.mxu0 0
    %307 = vmatprep.subr.bf16.mxu0 0
    %308 = vmatpush2.bf16.msra.mxu0 0
    %309 = vmatprep.subr.bf16.mxu0 0
    %310 = vmatpush2.bf16.msra.mxu0 0
    %311 = vmatprep.mubr.bf16.mxu0 0
    %312 = vmatmul.mubr.bf16.gmra.mxu0 %v205
    %v313 = vpop.f32.mrf.mxu0
    %v314 = vadd.f32 %v229, %v313
    %v315 = vpop.f32.mrf.mxu0
    %v316 = vpop.f32.mrf.mxu0
    %v317 = vpop.f32.mrf.mxu0
    %318 = vdwg.mxu0
    %v319 = vtanh.pop %v314
    %v320 = vpack.c.bf16 %v319, %v319
    %s321 = scalar_lea.vmem [#allocation2], 128
    %v322 = vld [vmem:[%s321] sm:$0xf]
    %v323 = vld [vmem:[%s321 + $0x4] sm:$0xf]
    %v324 = vld [vmem:[%s321 + $0x8] sm:$0xf]
    %v325 = vld [vmem:[%s321 + $0xc] sm:$0xf]
    %v326 = vld [vmem:[%s321 + $0x10] sm:$0xf]
    %v327 = vld [vmem:[%s321 + $0x14] sm:$0xf]
    %v328 = vld [vmem:[%s321 + $0x18] sm:$0xf]
    %v329 = vld [vmem:[%s321 + $0x1c] sm:$0xf]
    %v330 = vld [vmem:[%s321 + $0x20] sm:$0xf]
    %v331 = vld [vmem:[%s321 + $0x24] sm:$0xf]
    %v332 = vld [vmem:[%s321 + $0x28] sm:$0xf]
    %v333 = vld [vmem:[%s321 + $0x2c] sm:$0xf]
    %v334 = vld [vmem:[%s321 + $0x30] sm:$0xf]
    %v335 = vld [vmem:[%s321 + $0x34] sm:$0xf]
    %v336 = vld [vmem:[%s321 + $0x38] sm:$0xf]
    %v337 = vld [vmem:[%s321 + $0x3c] sm:$0xf]
    %s338 = scalar_lea.vmem %s3, 3
    %v339 = vld [vmem:[%s338] sm:$0x1]
    %v341 = vlaneseq
    %v342 = vshrl.u32 %v341, 7
    %v343 = vsub.s32 0, %v342
    %v344 = vrot.slane %v339, %v343
    %v362 = vunpack.c.l.b16 %v322
    %v363 = vunpack.c.l.b16 %v323
    %v364 = vunpack.c.l.b16 %v324
    %v365 = vunpack.c.l.b16 %v325
    %v366 = vunpack.c.l.b16 %v326
    %v367 = vunpack.c.l.b16 %v327
    %v368 = vunpack.c.l.b16 %v328
    %v369 = vunpack.c.l.b16 %v329
    %v370 = vunpack.c.l.b16 %v330
    %v371 = vunpack.c.l.b16 %v331
    %v372 = vunpack.c.l.b16 %v332
    %v373 = vunpack.c.l.b16 %v333
    %v374 = vunpack.c.l.b16 %v334
    %v375 = vunpack.c.l.b16 %v335
    %v376 = vunpack.c.l.b16 %v336
    %v377 = vunpack.c.l.b16 %v337
    %v378 = vpack.c.b16 %v363, %v362
    %v379 = vpack.c.b16 %v365, %v364
    %v380 = vpack.c.b16 %v367, %v366
    %v381 = vpack.c.b16 %v369, %v368
    %v382 = vpack.c.b16 %v371, %v370
    %v383 = vpack.c.b16 %v373, %v372
    %v384 = vpack.c.b16 %v375, %v374
    %v385 = vpack.c.b16 %v377, %v376
    %394 = vmatprep.subr.bf16.mxu0 0
    %395 = vmatpush1.bf16.msra.mxu0 %v385
    %396 = vmatprep.subr.bf16.mxu0 0
    %397 = vmatpush1.bf16.msra.mxu0 %v384
    %398 = vmatprep.subr.bf16.mxu0 0
    %399 = vmatpush1.bf16.msra.mxu0 %v383
    %400 = vmatprep.subr.bf16.mxu0 0
    %401 = vmatpush1.bf16.msra.mxu0 %v382
    %402 = vmatprep.subr.bf16.mxu0 0
    %403 = vmatpush1.bf16.msra.mxu0 %v381
    %404 = vmatprep.subr.bf16.mxu0 0
    %405 = vmatpush1.bf16.msra.mxu0 %v380
    %406 = vmatprep.subr.bf16.mxu0 0
    %407 = vmatpush1.bf16.msra.mxu0 %v379
    %408 = vmatprep.subr.bf16.mxu0 0
    %409 = vmatpush1.bf16.msra.mxu0 %v378
    %410 = vmatprep.subr.bf16.mxu0 0
    %411 = vmatpush2.bf16.msra.mxu0 0
    %412 = vmatprep.subr.bf16.mxu0 0
    %413 = vmatpush2.bf16.msra.mxu0 0
    %414 = vmatprep.subr.bf16.mxu0 0
    %415 = vmatpush2.bf16.msra.mxu0 0
    %416 = vmatprep.subr.bf16.mxu0 0
    %417 = vmatpush2.bf16.msra.mxu0 0
    %418 = vmatprep.subr.bf16.mxu0 0
    %419 = vmatpush2.bf16.msra.mxu0 0
    %420 = vmatprep.subr.bf16.mxu0 0
    %421 = vmatpush2.bf16.msra.mxu0 0
    %422 = vmatprep.subr.bf16.mxu0 0
    %423 = vmatpush2.bf16.msra.mxu0 0
    %424 = vmatprep.subr.bf16.mxu0 0
    %425 = vmatpush2.bf16.msra.mxu0 0
    %426 = vmatprep.mubr.bf16.mxu0 0
    %427 = vmatmul.mubr.bf16.gmra.mxu0 %v320
    %v428 = vpop.f32.mrf.mxu0
    %v429 = vadd.f32 %v344, %v428
    %v430 = vpop.f32.mrf.mxu0
    %v431 = vpop.f32.mrf.mxu0
    %v432 = vpop.f32.mrf.mxu0
    %433 = vdwg.mxu0
    %v434 = vtanh.pop %v429
    %v435 = vpack.c.bf16 %v434, %v434
    %s436 = scalar_lea.vmem [#allocation2], 192
    %v437 = vld [vmem:[%s436] sm:$0xf]
    %v438 = vld [vmem:[%s436 + $0x4] sm:$0xf]
    %v439 = vld [vmem:[%s436 + $0x8] sm:$0xf]
    %v440 = vld [vmem:[%s436 + $0xc] sm:$0xf]
    %v441 = vld [vmem:[%s436 + $0x10] sm:$0xf]
    %v442 = vld [vmem:[%s436 + $0x14] sm:$0xf]
    %v443 = vld [vmem:[%s436 + $0x18] sm:$0xf]
    %v444 = vld [vmem:[%s436 + $0x1c] sm:$0xf]
    %v445 = vld [vmem:[%s436 + $0x20] sm:$0xf]
    %v446 = vld [vmem:[%s436 + $0x24] sm:$0xf]
    %v447 = vld [vmem:[%s436 + $0x28] sm:$0xf]
    %v448 = vld [vmem:[%s436 + $0x2c] sm:$0xf]
    %v449 = vld [vmem:[%s436 + $0x30] sm:$0xf]
    %v450 = vld [vmem:[%s436 + $0x34] sm:$0xf]
    %v451 = vld [vmem:[%s436 + $0x38] sm:$0xf]
    %v452 = vld [vmem:[%s436 + $0x3c] sm:$0xf]
    %s453 = scalar_lea.vmem %s3, 4
    %v454 = vld [vmem:[%s453] sm:$0x1]
    %v456 = vlaneseq
    %v457 = vshrl.u32 %v456, 7
    %v458 = vsub.s32 0, %v457
    %v459 = vrot.slane %v454, %v458
    %v477 = vunpack.c.l.b16 %v437
    %v478 = vunpack.c.l.b16 %v438
    %v479 = vunpack.c.l.b16 %v439
    %v480 = vunpack.c.l.b16 %v440
    %v481 = vunpack.c.l.b16 %v441
    %v482 = vunpack.c.l.b16 %v442
    %v483 = vunpack.c.l.b16 %v443
    %v484 = vunpack.c.l.b16 %v444
    %v485 = vunpack.c.l.b16 %v445
    %v486 = vunpack.c.l.b16 %v446
    %v487 = vunpack.c.l.b16 %v447
    %v488 = vunpack.c.l.b16 %v448
    %v489 = vunpack.c.l.b16 %v449
    %v490 = vunpack.c.l.b16 %v450
    %v491 = vunpack.c.l.b16 %v451
    %v492 = vunpack.c.l.b16 %v452
    %v493 = vpack.c.b16 %v478, %v477
    %v494 = vpack.c.b16 %v480, %v479
    %v495 = vpack.c.b16 %v482, %v481
    %v496 = vpack.c.b16 %v484, %v483
    %v497 = vpack.c.b16 %v486, %v485
    %v498 = vpack.c.b16 %v488, %v487
    %v499 = vpack.c.b16 %v490, %v489
    %v500 = vpack.c.b16 %v492, %v491
    %509 = vmatprep.subr.bf16.mxu0 0
    %510 = vmatpush1.bf16.msra.mxu0 %v500
    %511 = vmatprep.subr.bf16.mxu0 0
    %512 = vmatpush1.bf16.msra.mxu0 %v499
    %513 = vmatprep.subr.bf16.mxu0 0
    %514 = vmatpush1.bf16.msra.mxu0 %v498
    %515 = vmatprep.subr.bf16.mxu0 0
    %516 = vmatpush1.bf16.msra.mxu0 %v497
    %517 = vmatprep.subr.bf16.mxu0 0
    %518 = vmatpush1.bf16.msra.mxu0 %v496
    %519 = vmatprep.subr.bf16.mxu0 0
    %520 = vmatpush1.bf16.msra.mxu0 %v495
    %521 = vmatprep.subr.bf16.mxu0 0
    %522 = vmatpush1.bf16.msra.mxu0 %v494
    %523 = vmatprep.subr.bf16.mxu0 0
    %524 = vmatpush1.bf16.msra.mxu0 %v493
    %525 = vmatprep.subr.bf16.mxu0 0
    %526 = vmatpush2.bf16.msra.mxu0 0
    %527 = vmatprep.subr.bf16.mxu0 0
    %528 = vmatpush2.bf16.msra.mxu0 0
    %529 = vmatprep.subr.bf16.mxu0 0
    %530 = vmatpush2.bf16.msra.mxu0 0
    %531 = vmatprep.subr.bf16.mxu0 0
    %532 = vmatpush2.bf16.msra.mxu0 0
    %533 = vmatprep.subr.bf16.mxu0 0
    %534 = vmatpush2.bf16.msra.mxu0 0
    %535 = vmatprep.subr.bf16.mxu0 0
    %536 = vmatpush2.bf16.msra.mxu0 0
    %537 = vmatprep.subr.bf16.mxu0 0
    %538 = vmatpush2.bf16.msra.mxu0 0
    %539 = vmatprep.subr.bf16.mxu0 0
    %540 = vmatpush2.bf16.msra.mxu0 0
    %541 = vmatprep.mubr.bf16.mxu0 0
    %542 = vmatmul.mubr.bf16.gmra.mxu0 %v435
    %v543 = vpop.f32.mrf.mxu0
    %v544 = vadd.f32 %v459, %v543
    %v545 = vpop.f32.mrf.mxu0
    %v546 = vpop.f32.mrf.mxu0
    %v547 = vpop.f32.mrf.mxu0
    %548 = vdwg.mxu0
    %549 = vst [vmem:[%s4] sm:$0xff] %v544
    // Predicated region
    $region22: #{ae_forward_fused.1} parent=1 // pred_check
      _
    $region23: #{ae_forward_fused.1} parent=1 // pred_check_branch
      %551 = sbr.rel (0) target = $region25
    $region24: #{ae_forward_fused.1} parent=1 // pred_region
      _
    $region25: #{ae_forward_fused.1} parent=1 // pred_fallthru
      _
    // Predicated region
    $region26: #{ae_forward_fused.1} parent=1 // pred_check
      _
    $region27: #{ae_forward_fused.1} parent=1 // pred_check_branch
      %553 = sbr.rel (0) target = $region29
    $region28: #{ae_forward_fused.1} parent=1 // pred_region
      _
    $region29: #{ae_forward_fused.1} parent=1 // pred_fallthru
      _
    %554 = vsyncpa [#allocation3], 1

</llo_original>
